<compile_context>
chip_gen: v6e
topology: v6e:2x2x1
jax: 0.10.0
libtpu: 0.0.40
codegen_flags: <defaults>
</compile_context>

<pallas_src>
import functools

import jax
import jax.numpy as jnp
from jax import lax
from jax.experimental import pallas as pl
from jax.experimental.pallas import tpu as pltpu


def _round_up(x, m):
    return ((x + m - 1) // m) * m


def _fit_tile(target, dim, align):
    """Largest tile <= target (multiple of `align`); prefers exact divisors of
    `dim` so the padding fallback is only hit for oddball dims."""
    target = max(align, (target // align) * align)
    if dim <= target:
        return _round_up(dim, align)
    t = target
    while t >= align:
        if dim % t == 0:
            return t
        t -= align
    return target  # no aligned divisor -> pad


# --- kernel variants (specialized in the wrapper; grid shape is static) -----

def _kernel_single_k(precision, x_ref, w_ref, b_ref, o_ref):
    # Whole (padded) K in one tile: no reduction axis, no scratch.
    acc = jnp.dot(x_ref[...], w_ref[...],
                  preferred_element_type=jnp.float32, precision=precision)
    o_ref[...] = (acc + b_ref[...]).astype(o_ref.dtype)


def _kernel_acc_inplace(precision, x_ref, w_ref, b_ref, o_ref):
    # fp32 output: accumulate directly into the resident output block.
    k = pl.program_id(2)

    @pl.when(k == 0)
    def _():
        o_ref[...] = jnp.broadcast_to(b_ref[...], o_ref.shape)

    o_ref[...] += jnp.dot(x_ref[...], w_ref[...],
                          preferred_element_type=jnp.float32,
                          precision=precision)


def _kernel_acc_scratch(precision, x_ref, w_ref, b_ref, o_ref, acc_ref):
    # Non-fp32 output: fp32 VMEM accumulator, bias folded into the init.
    k = pl.program_id(2)

    @pl.when(k == 0)
    def _():
        acc_ref[...] = jnp.broadcast_to(b_ref[...], acc_ref.shape)

    acc_ref[...] += jnp.dot(x_ref[...], w_ref[...],
                            preferred_element_type=jnp.float32,
                            precision=precision)

    @pl.when(k == pl.num_programs(2) - 1)
    def _():
        o_ref[...] = acc_ref[...].astype(o_ref.dtype)


@functools.partial(jax.jit, static_argnames=("tm", "tn", "tk", "compute_dtype"))
def conv1d(x, w, b, *, tm=512, tn=512, tk=512, compute_dtype=None):
    """Conv1D forward: out[..., f] = sum_k x[..., k] * w[k, f] + b[f].

    compute_dtype=jnp.bfloat16 is the MXU-native fast path (fp32 accumulation
    is kept); the default (None) preserves exact fp32 addmm semantics.
    """
    *lead, nx = x.shape
    nf = w.shape[-1]
    m = 1
    for d in lead:
        m *= d

    out_dtype = x.dtype
    if compute_dtype is not None:
        x = x.astype(compute_dtype)
        w = w.astype(compute_dtype)

    x2 = x.reshape(m, nx)
    b_f32 = b.astype(jnp.float32)

    csize = jnp.dtype(x2.dtype).itemsize
    osize = jnp.dtype(out_dtype).itemsize
    # Sub-32-bit dtypes pack rows along sublanes: keep tm a multiple of
    # 8 * packing (16 for bf16, 32 for int8/fp8).
    align_m = 8 * max(1, 4 // csize)

    tm_e = _fit_tile(tm, m, align_m)
    tk_e = _fit_tile(tk, nx, 128)
    tn_e = _fit_tile(tn, nf, 128)

    m_p = _round_up(m, tm_e)
    k_p = _round_up(nx, tk_e)
    n_p = _round_up(nf, tn_e)

    # Padding fallback (exact: padded-K terms contribute 0; padded M/N rows
    # are sliced off).  Tile selection above avoids this for tile-aligned dims.
    if (m_p, k_p) != (m, nx):
        x2 = jnp.pad(x2, ((0, m_p - m), (0, k_p - nx)))
    if (k_p, n_p) != (nx, nf):
        w = jnp.pad(w, ((0, k_p - nx), (0, n_p - nf)))
    b2 = jnp.pad(b_f32, (0, n_p - nf)).reshape(1, n_p)

    grid_m, grid_n, grid_k = m_p // tm_e, n_p // tn_e, k_p // tk_e

    # Exact-fp32 MXU path for fp32 operands (torch.addmm parity); default
    # precision for bf16/other operands.
    precision = lax.Precision.HIGHEST if x2.dtype == jnp.float32 else None

    # Streamed HBM traffic: x row-panels re-read per N-tile, w col-panels
    # re-read per M-tile, bias per M-tile, one output pass.
    flops = 2 * m_p * k_p * n_p
    bytes_accessed = (
        m_p * k_p * csize * grid_n
        + k_p * n_p * csize * grid_m
        + n_p * 4 * grid_m
        + m_p * n_p * osize
    )
    cost = pl.CostEstimate(flops=flops, transcendentals=0,
                           bytes_accessed=bytes_accessed)

    single_k = grid_k == 1
    inplace_acc = (not single_k) and out_dtype == jnp.float32

    # Per-call VMEM budget: double-buffered input/output blocks (+ bias) and
    # the fp32 accumulator when used.  Passed explicitly so larger user tiles
    # (e.g. 1024 on v6e) don't trip the default scoped-VMEM limit; capped at
    # 64 MiB (v7x physical per-TC VMEM).
    vmem_est = (
        2 * (tm_e * tk_e + tk_e * tn_e) * csize
        + 2 * tm_e * tn_e * osize
        + 2 * tn_e * 4
        + (tm_e * tn_e * 4 if (not single_k and not inplace_acc) else 0)
    )
    vmem_limit = int(min(max(vmem_est + (4 << 20), 32 << 20), 64 << 20))

    if single_k:
        kernel = functools.partial(_kernel_single_k, precision)
        grid = (grid_m, grid_n)
        in_specs = [
            pl.BlockSpec((tm_e, tk_e), lambda i, j: (i, 0)),
            pl.BlockSpec((tk_e, tn_e), lambda i, j: (0, j)),
            pl.BlockSpec((1, tn_e), lambda i, j: (0, j)),
        ]
        out_specs = pl.BlockSpec((tm_e, tn_e), lambda i, j: (i, j))
        scratch_shapes = []
        dim_sem = ("parallel", "parallel")
    else:
        grid = (grid_m, grid_n, grid_k)
        in_specs = [
            pl.BlockSpec((tm_e, tk_e), lambda i, j, k: (i, k)),
            pl.BlockSpec((tk_e, tn_e), lambda i, j, k: (k, j)),
            pl.BlockSpec((1, tn_e), lambda i, j, k: (0, j)),
        ]
        out_specs = pl.BlockSpec((tm_e, tn_e), lambda i, j, k: (i, j))
        dim_sem = ("parallel", "parallel", "arbitrary")
        if inplace_acc:
            kernel = functools.partial(_kernel_acc_inplace, precision)
            scratch_shapes = []
        else:
            kernel = functools.partial(_kernel_acc_scratch, precision)
            scratch_shapes = [pltpu.VMEM((tm_e, tn_e), jnp.float32)]

    out = pl.pallas_call(
        kernel,
        out_shape=jax.ShapeDtypeStruct((m_p, n_p), out_dtype),
        grid_spec=pltpu.PrefetchScalarGridSpec(
            num_scalar_prefetch=0,
            grid=grid,
            in_specs=in_specs,
            out_specs=out_specs,
            scratch_shapes=scratch_shapes,
        ),
        compiler_params=pltpu.CompilerParams(
            dimension_semantics=dim_sem,
            vmem_limit_bytes=vmem_limit,
        ),
        cost_estimate=cost,
    )(x2, w, b2)

    out = out[:m, :nf]
    return out.reshape(*lead, nf)


if __name__ == "__main__":
    key = jax.random.PRNGKey(0)
    kx1, kw1, kb1, kx2, kw2, kb2 = jax.random.split(key, 6)

    def ref_conv1d(x, w, b):
        m = x.reshape(-1, x.shape[-1])
        y = jnp.dot(m, w, precision=lax.Precision.HIGHEST) + b
        return y.reshape(*x.shape[:-1], w.shape[-1])

    # --- case 1: tiny GPT-style shapes, single K-step path (fp32 exact) -----
    batch, seq, nx, nf = 2, 8, 32, 64
    w1 = 0.02 * jax.random.normal(kw1, (nx, nf), dtype=jnp.float32)
    b1 = 0.02 * jax.random.normal(kb1, (nf,), dtype=jnp.float32)
    x1 = jax.random.normal(kx1, (batch, seq, nx), dtype=jnp.float32)

    out1 = jax.block_until_ready(conv1d(x1, w1, b1))
    ref1 = ref_conv1d(x1, w1, b1)
    assert out1.shape == (batch, seq, nf)
    assert jnp.allclose(out1, ref1, atol=1e-5, rtol=1e-5)

    # bf16 fast path (MXU-native operands, fp32 accumulation).
    out1_bf = jax.block_until_ready(conv1d(x1, w1, b1, compute_dtype=jnp.bfloat16))
    assert out1_bf.shape == (batch, seq, nf)
    assert jnp.allclose(out1_bf.astype(jnp.float32), ref1, atol=5e-2, rtol=5e-2)

    # --- case 2: multi K-step, fp32 output -> in-place accumulation path ----
    nx2, nf2 = 256, 128
    w2 = 0.02 * jax.random.normal(kw2, (nx2, nf2), dtype=jnp.float32)
    b2 = 0.02 * jax.random.normal(kb2, (nf2,), dtype=jnp.float32)
    x2 = jax.random.normal(kx2, (batch, seq, nx2), dtype=jnp.float32)

    out2 = jax.block_until_ready(conv1d(x2, w2, b2, tk=128))  # 2 K steps
    ref2 = ref_conv1d(x2, w2, b2)
    assert out2.shape == (batch, seq, nf2)
    assert jnp.allclose(out2, ref2, atol=1e-4, rtol=1e-4)

    # --- case 3: multi K-step, bf16 in/out -> scratch-accumulator path ------
    x3 = x2.astype(jnp.bfloat16)
    w3 = w2.astype(jnp.bfloat16)
    out3 = jax.block_until_ready(conv1d(x3, w3, b2, tk=128))
    assert out3.shape == (batch, seq, nf2)
    assert out3.dtype == jnp.bfloat16
    assert jnp.allclose(out3.astype(jnp.float32), ref2, atol=5e-2, rtol=5e-2)

    print("KERNEL_OK")
</pallas_src>

<mosaic_0001>
module attributes {stable_mosaic.version = 11 : i64} {
  func.func @_kernel_single_k(%arg0: i32, %arg1: i32, %arg2: memref<16x128xf32, #tpu.memory_space<vmem>>, %arg3: memref<128x128xf32, #tpu.memory_space<vmem>>, %arg4: memref<1x128xf32, #tpu.memory_space<vmem>>, %arg5: memref<16x128xf32, #tpu.memory_space<vmem>>) attributes {dimension_semantics = [#tpu.dimension_semantics<parallel>, #tpu.dimension_semantics<parallel>], iteration_bounds = array<i64: 1, 1>, scalar_prefetch = 0 : i64, scratch_operands = 0 : i64, tpu.core_type = #tpu.core_type<tc>, window_params = [{transform_indices = @transform_0, window_bounds = array<i64: 16, 128>}, {transform_indices = @transform_1, window_bounds = array<i64: 128, 128>}, {transform_indices = @transform_2, window_bounds = array<i64: 1, 128>}, {transform_indices = @transform_3, window_bounds = array<i64: 16, 128>}]} {
    %c0 = arith.constant 0 : index
    %c0_0 = arith.constant 0 : index
    %0 = vector.load %arg2[%c0, %c0_0] : memref<16x128xf32, #tpu.memory_space<vmem>>, vector<16x128xf32>
    %c0_1 = arith.constant 0 : index
    %c0_2 = arith.constant 0 : index
    %1 = vector.load %arg3[%c0_1, %c0_2] : memref<128x128xf32, #tpu.memory_space<vmem>>, vector<128x128xf32>
    %cst = arith.constant dense<0.000000e+00> : vector<16x128xf32>
    %2 = tpu.matmul %0, %1, %cst {dimension_numbers = #tpu.dot_dimension_numbers<[1], [0], [0], [1], [0, 0, 1, 1], [], []>, precision = #tpu.contract_precision<fp32>} : vector<16x128xf32>, vector<128x128xf32>, vector<16x128xf32> -> vector<16x128xf32>
    %c0_3 = arith.constant 0 : index
    %c0_4 = arith.constant 0 : index
    %3 = vector.load %arg4[%c0_3, %c0_4] : memref<1x128xf32, #tpu.memory_space<vmem>>, vector<1x128xf32>
    %4 = vector.broadcast %3 : vector<1x128xf32> to vector<16x128xf32>
    %5 = arith.addf %2, %4 : vector<16x128xf32>
    %c0_5 = arith.constant 0 : index
    %c0_6 = arith.constant 0 : index
    %6 = vector.load %arg5[%c0_5, %c0_6] : memref<16x128xf32, #tpu.memory_space<vmem>>, vector<16x128xf32>
    tpu.vector_store %arg5[%c0_5, %c0_6], %5 {strides = array<i32>} : memref<16x128xf32, #tpu.memory_space<vmem>>, vector<16x128xf32>,
    return
  }
  func.func @transform_0(%arg0: i32, %arg1: i32) -> (i32, i32) {
    %c0_i32 = arith.constant 0 : i32
    %c0_i32_0 = arith.constant 0 : i32
    return %arg0, %c0_i32 : i32, i32
  }
  func.func @transform_1(%arg0: i32, %arg1: i32) -> (i32, i32) {
    %c0_i32 = arith.constant 0 : i32
    %c0_i32_0 = arith.constant 0 : i32
    return %c0_i32, %arg1 : i32, i32
  }
  func.func @transform_2(%arg0: i32, %arg1: i32) -> (i32, i32) {
    %c0_i32 = arith.constant 0 : i32
    %c0_i32_0 = arith.constant 0 : i32
    return %c0_i32, %arg1 : i32, i32
  }
  func.func @transform_3(%arg0: i32, %arg1: i32) -> (i32, i32) {
    %c0_i32 = arith.constant 0 : i32
    return %arg0, %arg1 : i32, i32
  }
}

</mosaic_0001>

<llo_original>
// kernel: conv1d.1
$region0: #{conv1d.1}
  #allocation0 [shape = 'u32[]', space=smem, size = 0x4, offset = 0x4, fixed_abs, tag = 'smem constant byte address 0x4 - core index']
  #allocation1 [shape = 'u32[144,128]{1,0:T(1,128)}', space=vmem, size = 0x12000, scoped, tag = 'internal scratch']
  %s0 = inlined_call_operand.vmem [shape: f32[16,128], index: 0, kind: input, shape index: {}]
  %s1 = inlined_call_operand.vmem [shape: f32[128,128], index: 1, kind: input, shape index: {}]
  %s2 = inlined_call_operand.vmem [shape: f32[1,128], index: 2, kind: input, shape index: {}]
  %s3 = inlined_call_operand.vmem [shape: f32[16,128], index: 3, kind: output, shape index: {}]
  %s4 = sld [smem:[#allocation0]]
  $region22: #{conv1d.1} parent=0
    _
  %s6 = ssub.s32 1, %s4
  %s7 = scalar_select 0, %s6, %s4
  // Predicated region
  $region2: #{conv1d.1} parent=0 // pred_check
    _
  $region3: #{conv1d.1} parent=0 // pred_check_branch
    %9 = sbr.rel (0) target = $region5
  $region4: #{conv1d.1} parent=0 // pred_region
    _
  $region5: #{conv1d.1} parent=0 // pred_fallthru
    _
  // Predicated region
  $region6: #{conv1d.1} parent=0 // pred_check
    _
  $region7: #{conv1d.1} parent=0 // pred_check_branch
    %11 = sbr.rel (0) target = $region9
  $region8: #{conv1d.1} parent=0 // pred_region
    _
  $region9: #{conv1d.1} parent=0 // pred_fallthru
    _
  // Predicated region
  $region10: #{conv1d.1} parent=0 // pred_check
    _
  $region11: #{conv1d.1} parent=0 // pred_check_branch
    %13 = sbr.rel (0) target = $region13
  $region12: #{conv1d.1} parent=0 // pred_region
    _
  $region13: #{conv1d.1} parent=0 // pred_fallthru
    _
  %v14 = vld [vmem:[%s0] sm:$0xff]
  %v15 = vld [vmem:[%s0 + $0x8] sm:$0xff]
  %v16 = vld [vmem:[%s1] sm:$0xff]
  %v17 = vld [vmem:[%s1 + $0x8] sm:$0xff]
  %v18 = vld [vmem:[%s1 + $0x10] sm:$0xff]
  %v19 = vld [vmem:[%s1 + $0x18] sm:$0xff]
  %v20 = vld [vmem:[%s1 + $0x20] sm:$0xff]
  %v21 = vld [vmem:[%s1 + $0x28] sm:$0xff]
  %v22 = vld [vmem:[%s1 + $0x30] sm:$0xff]
  %v23 = vld [vmem:[%s1 + $0x38] sm:$0xff]
  %v24 = vld [vmem:[%s1 + $0x40] sm:$0xff]
  %v25 = vld [vmem:[%s1 + $0x48] sm:$0xff]
  %v26 = vld [vmem:[%s1 + $0x50] sm:$0xff]
  %v27 = vld [vmem:[%s1 + $0x58] sm:$0xff]
  %v28 = vld [vmem:[%s1 + $0x60] sm:$0xff]
  %v29 = vld [vmem:[%s1 + $0x68] sm:$0xff]
  %v30 = vld [vmem:[%s1 + $0x70] sm:$0xff]
  %v31 = vld [vmem:[%s1 + $0x78] sm:$0xff]
  %v32 = vld [vmem:[%s2] sm:$0x1]
  %v34 = vlaneseq
  %v35 = vshrl.u32 %v34, 7
  %v36 = vsub.s32 0, %v35
  %v37 = vrot.slane %v32, %v36
  %39 = vmatprep.subr.mxu0 0.0
  %v40 = vand.u32 %v31, 4294901760
  %41 = vmatpush1.msra.mxu0 %v40
  %42 = vmatprep.subr.mxu0 0.0
  %v43 = vand.u32 %v30, 4294901760
  %44 = vmatpush1.msra.mxu0 %v43
  %45 = vmatprep.subr.mxu0 0.0
  %v46 = vand.u32 %v29, 4294901760
  %47 = vmatpush1.msra.mxu0 %v46
  %48 = vmatprep.subr.mxu0 0.0
  %v49 = vand.u32 %v28, 4294901760
  %50 = vmatpush1.msra.mxu0 %v49
  %51 = vmatprep.subr.mxu0 0.0
  %v52 = vand.u32 %v27, 4294901760
  %53 = vmatpush1.msra.mxu0 %v52
  %54 = vmatprep.subr.mxu0 0.0
  %v55 = vand.u32 %v26, 4294901760
  %56 = vmatpush1.msra.mxu0 %v55
  %57 = vmatprep.subr.mxu0 0.0
  %v58 = vand.u32 %v25, 4294901760
  %59 = vmatpush1.msra.mxu0 %v58
  %60 = vmatprep.subr.mxu0 0.0
  %v61 = vand.u32 %v24, 4294901760
  %62 = vmatpush1.msra.mxu0 %v61
  %63 = vmatprep.subr.mxu0 0.0
  %v64 = vand.u32 %v23, 4294901760
  %65 = vmatpush1.msra.mxu0 %v64
  %66 = vmatprep.subr.mxu0 0.0
  %v67 = vand.u32 %v22, 4294901760
  %68 = vmatpush1.msra.mxu0 %v67
  %69 = vmatprep.subr.mxu0 0.0
  %v70 = vand.u32 %v21, 4294901760
  %71 = vmatpush1.msra.mxu0 %v70
  %72 = vmatprep.subr.mxu0 0.0
  %v73 = vand.u32 %v20, 4294901760
  %74 = vmatpush1.msra.mxu0 %v73
  %75 = vmatprep.subr.mxu0 0.0
  %v76 = vand.u32 %v19, 4294901760
  %77 = vmatpush1.msra.mxu0 %v76
  %78 = vmatprep.subr.mxu0 0.0
  %v79 = vand.u32 %v18, 4294901760
  %80 = vmatpush1.msra.mxu0 %v79
  %81 = vmatprep.subr.mxu0 0.0
  %v82 = vand.u32 %v17, 4294901760
  %83 = vmatpush1.msra.mxu0 %v82
  %84 = vmatprep.subr.mxu0 0.0
  %v85 = vand.u32 %v16, 4294901760
  %86 = vmatpush1.msra.mxu0 %v85
  %87 = vmatprep.subr.mxu0 0.0
  %88 = vmatpush2.msra.mxu0 0.0
  %89 = vmatprep.subr.mxu0 0.0
  %90 = vmatpush2.msra.mxu0 0.0
  %91 = vmatprep.subr.mxu0 0.0
  %92 = vmatpush2.msra.mxu0 0.0
  %93 = vmatprep.subr.mxu0 0.0
  %94 = vmatpush2.msra.mxu0 0.0
  %95 = vmatprep.subr.mxu0 0.0
  %96 = vmatpush2.msra.mxu0 0.0
  %97 = vmatprep.subr.mxu0 0.0
  %98 = vmatpush2.msra.mxu0 0.0
  %99 = vmatprep.subr.mxu0 0.0
  %100 = vmatpush2.msra.mxu0 0.0
  %101 = vmatprep.subr.mxu0 0.0
  %102 = vmatpush2.msra.mxu0 0.0
  %103 = vmatprep.subr.mxu0 0.0
  %104 = vmatpush2.msra.mxu0 0.0
  %105 = vmatprep.subr.mxu0 0.0
  %106 = vmatpush2.msra.mxu0 0.0
  %107 = vmatprep.subr.mxu0 0.0
  %108 = vmatpush2.msra.mxu0 0.0
  %109 = vmatprep.subr.mxu0 0.0
  %110 = vmatpush2.msra.mxu0 0.0
  %111 = vmatprep.subr.mxu0 0.0
  %112 = vmatpush2.msra.mxu0 0.0
  %113 = vmatprep.subr.mxu0 0.0
  %114 = vmatpush2.msra.mxu0 0.0
  %115 = vmatprep.subr.mxu0 0.0
  %116 = vmatpush2.msra.mxu0 0.0
  %117 = vmatprep.subr.mxu0 0.0
  %118 = vmatpush2.msra.mxu0 0.0
  %119 = vmatprep.mubr.f32.mxu0 0.0
  %v120 = vand.u32 %v14, 4294901760
  %v121 = vsub.f32 %v14, %v120
  %v122 = vand.u32 %v121, 4294901760
  %v123 = vsub.f32 %v121, %v122
  %v124 = vand.u32 %v123, 4294901760
  %125 = vmatmul.mubr.f32.gmra.mxu0 %v124
  %v126 = vpop.f32.mrf.mxu0
  %v127 = vadd.f32 %v37, %v126
  %v128 = vpop.f32.mrf.mxu0
  %129 = vmatprep.mubr.f32.mxu0 0.0
  %v130 = vand.u32 %v15, 4294901760
  %v131 = vsub.f32 %v15, %v130
  %v132 = vand.u32 %v131, 4294901760
  %v133 = vsub.f32 %v131, %v132
  %v134 = vand.u32 %v133, 4294901760
  %135 = vmatmul.mubr.f32.gmra.mxu0 %v134
  %v136 = vpop.f32.mrf.mxu0
  %v137 = vadd.f32 %v37, %v136
  %v138 = vpop.f32.mrf.mxu0
  %139 = vdwg.mxu0
  %140 = vmatprep.subr.mxu0 0.0
  %v141 = vand.u32 %v31, 4294901760
  %v142 = vsub.f32 %v31, %v141
  %v143 = vand.u32 %v142, 4294901760
  %v144 = vsub.f32 %v142, %v143
  %v145 = vand.u32 %v144, 4294901760
  %146 = vmatpush1.msra.mxu0 %v145
  %147 = vmatprep.subr.mxu0 0.0
  %v148 = vand.u32 %v30, 4294901760
  %v149 = vsub.f32 %v30, %v148
  %v150 = vand.u32 %v149, 4294901760
  %v151 = vsub.f32 %v149, %v150
  %v152 = vand.u32 %v151, 4294901760
  %153 = vmatpush1.msra.mxu0 %v152
  %154 = vmatprep.subr.mxu0 0.0
  %v155 = vand.u32 %v29, 4294901760
  %v156 = vsub.f32 %v29, %v155
  %v157 = vand.u32 %v156, 4294901760
  %v158 = vsub.f32 %v156, %v157
  %v159 = vand.u32 %v158, 4294901760
  %160 = vmatpush1.msra.mxu0 %v159
  %161 = vmatprep.subr.mxu0 0.0
  %v162 = vand.u32 %v28, 4294901760
  %v163 = vsub.f32 %v28, %v162
  %v164 = vand.u32 %v163, 4294901760
  %v165 = vsub.f32 %v163, %v164
  %v166 = vand.u32 %v165, 4294901760
  %167 = vmatpush1.msra.mxu0 %v166
  %168 = vmatprep.subr.mxu0 0.0
  %v169 = vand.u32 %v27, 4294901760
  %v170 = vsub.f32 %v27, %v169
  %v171 = vand.u32 %v170, 4294901760
  %v172 = vsub.f32 %v170, %v171
  %v173 = vand.u32 %v172, 4294901760
  %174 = vmatpush1.msra.mxu0 %v173
  %175 = vmatprep.subr.mxu0 0.0
  %v176 = vand.u32 %v26, 4294901760
  %v177 = vsub.f32 %v26, %v176
  %v178 = vand.u32 %v177, 4294901760
  %v179 = vsub.f32 %v177, %v178
  %v180 = vand.u32 %v179, 4294901760
  %181 = vmatpush1.msra.mxu0 %v180
  %182 = vmatprep.subr.mxu0 0.0
  %v183 = vand.u32 %v25, 4294901760
  %v184 = vsub.f32 %v25, %v183
  %v185 = vand.u32 %v184, 4294901760
  %v186 = vsub.f32 %v184, %v185
  %v187 = vand.u32 %v186, 4294901760
  %188 = vmatpush1.msra.mxu0 %v187
  %189 = vmatprep.subr.mxu0 0.0
  %v190 = vand.u32 %v24, 4294901760
  %v191 = vsub.f32 %v24, %v190
  %v192 = vand.u32 %v191, 4294901760
  %v193 = vsub.f32 %v191, %v192
  %v194 = vand.u32 %v193, 4294901760
  %195 = vmatpush1.msra.mxu0 %v194
  %196 = vmatprep.subr.mxu0 0.0
  %v197 = vand.u32 %v23, 4294901760
  %v198 = vsub.f32 %v23, %v197
  %v199 = vand.u32 %v198, 4294901760
  %v200 = vsub.f32 %v198, %v199
  %v201 = vand.u32 %v200, 4294901760
  %202 = vmatpush1.msra.mxu0 %v201
  %203 = vmatprep.subr.mxu0 0.0
  %v204 = vand.u32 %v22, 4294901760
  %v205 = vsub.f32 %v22, %v204
  %v206 = vand.u32 %v205, 4294901760
  %v207 = vsub.f32 %v205, %v206
  %v208 = vand.u32 %v207, 4294901760
  %209 = vmatpush1.msra.mxu0 %v208
  %210 = vmatprep.subr.mxu0 0.0
  %v211 = vand.u32 %v21, 4294901760
  %v212 = vsub.f32 %v21, %v211
  %v213 = vand.u32 %v212, 4294901760
  %v214 = vsub.f32 %v212, %v213
  %v215 = vand.u32 %v214, 4294901760
  %216 = vmatpush1.msra.mxu0 %v215
  %217 = vmatprep.subr.mxu0 0.0
  %v218 = vand.u32 %v20, 4294901760
  %v219 = vsub.f32 %v20, %v218
  %v220 = vand.u32 %v219, 4294901760
  %v221 = vsub.f32 %v219, %v220
  %v222 = vand.u32 %v221, 4294901760
  %223 = vmatpush1.msra.mxu0 %v222
  %224 = vmatprep.subr.mxu0 0.0
  %v225 = vand.u32 %v19, 4294901760
  %v226 = vsub.f32 %v19, %v225
  %v227 = vand.u32 %v226, 4294901760
  %v228 = vsub.f32 %v226, %v227
  %v229 = vand.u32 %v228, 4294901760
  %230 = vmatpush1.msra.mxu0 %v229
  %231 = vmatprep.subr.mxu0 0.0
  %v232 = vand.u32 %v18, 4294901760
  %v233 = vsub.f32 %v18, %v232
  %v234 = vand.u32 %v233, 4294901760
  %v235 = vsub.f32 %v233, %v234
  %v236 = vand.u32 %v235, 4294901760
  %237 = vmatpush1.msra.mxu0 %v236
  %238 = vmatprep.subr.mxu0 0.0
  %v239 = vand.u32 %v17, 4294901760
  %v240 = vsub.f32 %v17, %v239
  %v241 = vand.u32 %v240, 4294901760
  %v242 = vsub.f32 %v240, %v241
  %v243 = vand.u32 %v242, 4294901760
  %244 = vmatpush1.msra.mxu0 %v243
  %245 = vmatprep.subr.mxu0 0.0
  %v246 = vand.u32 %v16, 4294901760
  %v247 = vsub.f32 %v16, %v246
  %v248 = vand.u32 %v247, 4294901760
  %v249 = vsub.f32 %v247, %v248
  %v250 = vand.u32 %v249, 4294901760
  %251 = vmatpush1.msra.mxu0 %v250
  %252 = vmatprep.subr.mxu0 0.0
  %253 = vmatpush2.msra.mxu0 0.0
  %254 = vmatprep.subr.mxu0 0.0
  %255 = vmatpush2.msra.mxu0 0.0
  %256 = vmatprep.subr.mxu0 0.0
  %257 = vmatpush2.msra.mxu0 0.0
  %258 = vmatprep.subr.mxu0 0.0
  %259 = vmatpush2.msra.mxu0 0.0
  %260 = vmatprep.subr.mxu0 0.0
  %261 = vmatpush2.msra.mxu0 0.0
  %262 = vmatprep.subr.mxu0 0.0
  %263 = vmatpush2.msra.mxu0 0.0
  %264 = vmatprep.subr.mxu0 0.0
  %265 = vmatpush2.msra.mxu0 0.0
  %266 = vmatprep.subr.mxu0 0.0
  %267 = vmatpush2.msra.mxu0 0.0
  %268 = vmatprep.subr.mxu0 0.0
  %269 = vmatpush2.msra.mxu0 0.0
  %270 = vmatprep.subr.mxu0 0.0
  %271 = vmatpush2.msra.mxu0 0.0
  %272 = vmatprep.subr.mxu0 0.0
  %273 = vmatpush2.msra.mxu0 0.0
  %274 = vmatprep.subr.mxu0 0.0
  %275 = vmatpush2.msra.mxu0 0.0
  %276 = vmatprep.subr.mxu0 0.0
  %277 = vmatpush2.msra.mxu0 0.0
  %278 = vmatprep.subr.mxu0 0.0
  %279 = vmatpush2.msra.mxu0 0.0
  %280 = vmatprep.subr.mxu0 0.0
  %281 = vmatpush2.msra.mxu0 0.0
  %282 = vmatprep.subr.mxu0 0.0
  %283 = vmatpush2.msra.mxu0 0.0
  %284 = vmatprep.mubr.f32.mxu0 0.0
  %v285 = vand.u32 %v14, 4294901760
  %286 = vmatmul.mubr.f32.gmra.mxu0 %v285
  %v287 = vpop.f32.mrf.mxu0
  %v288 = vadd.f32 %v127, %v287
  %v289 = vpop.f32.mrf.mxu0
  %290 = vmatprep.mubr.f32.mxu0 0.0
  %v291 = vand.u32 %v15, 4294901760
  %292 = vmatmul.mubr.f32.gmra.mxu0 %v291
  %v293 = vpop.f32.mrf.mxu0
  %v294 = vadd.f32 %v137, %v293
  %v295 = vpop.f32.mrf.mxu0
  %296 = vdwg.mxu0
  %297 = vmatprep.subr.mxu0 0.0
  %v298 = vand.u32 %v31, 4294901760
  %v299 = vsub.f32 %v31, %v298
  %300 = vmatpush1.msra.mxu0 %v299
  %301 = vmatprep.subr.mxu0 0.0
  %v302 = vand.u32 %v30, 4294901760
  %v303 = vsub.f32 %v30, %v302
  %304 = vmatpush1.msra.mxu0 %v303
  %305 = vmatprep.subr.mxu0 0.0
  %v306 = vand.u32 %v29, 4294901760
  %v307 = vsub.f32 %v29, %v306
  %308 = vmatpush1.msra.mxu0 %v307
  %309 = vmatprep.subr.mxu0 0.0
  %v310 = vand.u32 %v28, 4294901760
  %v311 = vsub.f32 %v28, %v310
  %312 = vmatpush1.msra.mxu0 %v311
  %313 = vmatprep.subr.mxu0 0.0
  %v314 = vand.u32 %v27, 4294901760
  %v315 = vsub.f32 %v27, %v314
  %316 = vmatpush1.msra.mxu0 %v315
  %317 = vmatprep.subr.mxu0 0.0
  %v318 = vand.u32 %v26, 4294901760
  %v319 = vsub.f32 %v26, %v318
  %320 = vmatpush1.msra.mxu0 %v319
  %321 = vmatprep.subr.mxu0 0.0
  %v322 = vand.u32 %v25, 4294901760
  %v323 = vsub.f32 %v25, %v322
  %324 = vmatpush1.msra.mxu0 %v323
  %325 = vmatprep.subr.mxu0 0.0
  %v326 = vand.u32 %v24, 4294901760
  %v327 = vsub.f32 %v24, %v326
  %328 = vmatpush1.msra.mxu0 %v327
  %329 = vmatprep.subr.mxu0 0.0
  %v330 = vand.u32 %v23, 4294901760
  %v331 = vsub.f32 %v23, %v330
  %332 = vmatpush1.msra.mxu0 %v331
  %333 = vmatprep.subr.mxu0 0.0
  %v334 = vand.u32 %v22, 4294901760
  %v335 = vsub.f32 %v22, %v334
  %336 = vmatpush1.msra.mxu0 %v335
  %337 = vmatprep.subr.mxu0 0.0
  %v338 = vand.u32 %v21, 4294901760
  %v339 = vsub.f32 %v21, %v338
  %340 = vmatpush1.msra.mxu0 %v339
  %341 = vmatprep.subr.mxu0 0.0
  %v342 = vand.u32 %v20, 4294901760
  %v343 = vsub.f32 %v20, %v342
  %344 = vmatpush1.msra.mxu0 %v343
  %345 = vmatprep.subr.mxu0 0.0
  %v346 = vand.u32 %v19, 4294901760
  %v347 = vsub.f32 %v19, %v346
  %348 = vmatpush1.msra.mxu0 %v347
  %349 = vmatprep.subr.mxu0 0.0
  %v350 = vand.u32 %v18, 4294901760
  %v351 = vsub.f32 %v18, %v350
  %352 = vmatpush1.msra.mxu0 %v351
  %353 = vmatprep.subr.mxu0 0.0
  %v354 = vand.u32 %v17, 4294901760
  %v355 = vsub.f32 %v17, %v354
  %356 = vmatpush1.msra.mxu0 %v355
  %357 = vmatprep.subr.mxu0 0.0
  %v358 = vand.u32 %v16, 4294901760
  %v359 = vsub.f32 %v16, %v358
  %360 = vmatpush1.msra.mxu0 %v359
  %361 = vmatprep.subr.mxu0 0.0
  %362 = vmatpush2.msra.mxu0 0.0
  %363 = vmatprep.subr.mxu0 0.0
  %364 = vmatpush2.msra.mxu0 0.0
  %365 = vmatprep.subr.mxu0 0.0
  %366 = vmatpush2.msra.mxu0 0.0
  %367 = vmatprep.subr.mxu0 0.0
  %368 = vmatpush2.msra.mxu0 0.0
  %369 = vmatprep.subr.mxu0 0.0
  %370 = vmatpush2.msra.mxu0 0.0
  %371 = vmatprep.subr.mxu0 0.0
  %372 = vmatpush2.msra.mxu0 0.0
  %373 = vmatprep.subr.mxu0 0.0
  %374 = vmatpush2.msra.mxu0 0.0
  %375 = vmatprep.subr.mxu0 0.0
  %376 = vmatpush2.msra.mxu0 0.0
  %377 = vmatprep.subr.mxu0 0.0
  %378 = vmatpush2.msra.mxu0 0.0
  %379 = vmatprep.subr.mxu0 0.0
  %380 = vmatpush2.msra.mxu0 0.0
  %381 = vmatprep.subr.mxu0 0.0
  %382 = vmatpush2.msra.mxu0 0.0
  %383 = vmatprep.subr.mxu0 0.0
  %384 = vmatpush2.msra.mxu0 0.0
  %385 = vmatprep.subr.mxu0 0.0
  %386 = vmatpush2.msra.mxu0 0.0
  %387 = vmatprep.subr.mxu0 0.0
  %388 = vmatpush2.msra.mxu0 0.0
  %389 = vmatprep.subr.mxu0 0.0
  %390 = vmatpush2.msra.mxu0 0.0
  %391 = vmatprep.subr.mxu0 0.0
  %392 = vmatpush2.msra.mxu0 0.0
  %393 = vmatprep.mubr.f32.mxu0 0.0
  %v394 = vand.u32 %v14, 4294901760
  %v395 = vsub.f32 %v14, %v394
  %396 = vmatmul.mubr.f32.gmra.mxu0 %v395
  %v397 = vpop.f32.mrf.mxu0
  %v398 = vadd.f32 %v288, %v397
  %v399 = vpop.f32.mrf.mxu0
  %400 = vmatprep.mubr.f32.mxu0 0.0
  %v401 = vand.u32 %v15, 4294901760
  %v402 = vsub.f32 %v15, %v401
  %403 = vmatmul.mubr.f32.gmra.mxu0 %v402
  %v404 = vpop.f32.mrf.mxu0
  %v405 = vadd.f32 %v294, %v404
  %v406 = vpop.f32.mrf.mxu0
  %407 = vdwg.mxu0
  %408 = vmatprep.subr.mxu0 0.0
  %v409 = vand.u32 %v31, 4294901760
  %410 = vmatpush1.msra.mxu0 %v409
  %411 = vmatprep.subr.mxu0 0.0
  %v412 = vand.u32 %v30, 4294901760
  %413 = vmatpush1.msra.mxu0 %v412
  %414 = vmatprep.subr.mxu0 0.0
  %v415 = vand.u32 %v29, 4294901760
  %416 = vmatpush1.msra.mxu0 %v415
  %417 = vmatprep.subr.mxu0 0.0
  %v418 = vand.u32 %v28, 4294901760
  %419 = vmatpush1.msra.mxu0 %v418
  %420 = vmatprep.subr.mxu0 0.0
  %v421 = vand.u32 %v27, 4294901760
  %422 = vmatpush1.msra.mxu0 %v421
  %423 = vmatprep.subr.mxu0 0.0
  %v424 = vand.u32 %v26, 4294901760
  %425 = vmatpush1.msra.mxu0 %v424
  %426 = vmatprep.subr.mxu0 0.0
  %v427 = vand.u32 %v25, 4294901760
  %428 = vmatpush1.msra.mxu0 %v427
  %429 = vmatprep.subr.mxu0 0.0
  %v430 = vand.u32 %v24, 4294901760
  %431 = vmatpush1.msra.mxu0 %v430
  %432 = vmatprep.subr.mxu0 0.0
  %v433 = vand.u32 %v23, 4294901760
  %434 = vmatpush1.msra.mxu0 %v433
  %435 = vmatprep.subr.mxu0 0.0
  %v436 = vand.u32 %v22, 4294901760
  %437 = vmatpush1.msra.mxu0 %v436
  %438 = vmatprep.subr.mxu0 0.0
  %v439 = vand.u32 %v21, 4294901760
  %440 = vmatpush1.msra.mxu0 %v439
  %441 = vmatprep.subr.mxu0 0.0
  %v442 = vand.u32 %v20, 4294901760
  %443 = vmatpush1.msra.mxu0 %v442
  %444 = vmatprep.subr.mxu0 0.0
  %v445 = vand.u32 %v19, 4294901760
  %446 = vmatpush1.msra.mxu0 %v445
  %447 = vmatprep.subr.mxu0 0.0
  %v448 = vand.u32 %v18, 4294901760
  %449 = vmatpush1.msra.mxu0 %v448
  %450 = vmatprep.subr.mxu0 0.0
  %v451 = vand.u32 %v17, 4294901760
  %452 = vmatpush1.msra.mxu0 %v451
  %453 = vmatprep.subr.mxu0 0.0
  %v454 = vand.u32 %v16, 4294901760
  %455 = vmatpush1.msra.mxu0 %v454
  %456 = vmatprep.subr.mxu0 0.0
  %457 = vmatpush2.msra.mxu0 0.0
  %458 = vmatprep.subr.mxu0 0.0
  %459 = vmatpush2.msra.mxu0 0.0
  %460 = vmatprep.subr.mxu0 0.0
  %461 = vmatpush2.msra.mxu0 0.0
  %462 = vmatprep.subr.mxu0 0.0
  %463 = vmatpush2.msra.mxu0 0.0
  %464 = vmatprep.subr.mxu0 0.0
  %465 = vmatpush2.msra.mxu0 0.0
  %466 = vmatprep.subr.mxu0 0.0
  %467 = vmatpush2.msra.mxu0 0.0
  %468 = vmatprep.subr.mxu0 0.0
  %469 = vmatpush2.msra.mxu0 0.0
  %470 = vmatprep.subr.mxu0 0.0
  %471 = vmatpush2.msra.mxu0 0.0
  %472 = vmatprep.subr.mxu0 0.0
  %473 = vmatpush2.msra.mxu0 0.0
  %474 = vmatprep.subr.mxu0 0.0
  %475 = vmatpush2.msra.mxu0 0.0
  %476 = vmatprep.subr.mxu0 0.0
  %477 = vmatpush2.msra.mxu0 0.0
  %478 = vmatprep.subr.mxu0 0.0
  %479 = vmatpush2.msra.mxu0 0.0
  %480 = vmatprep.subr.mxu0 0.0
  %481 = vmatpush2.msra.mxu0 0.0
  %482 = vmatprep.subr.mxu0 0.0
  %483 = vmatpush2.msra.mxu0 0.0
  %484 = vmatprep.subr.mxu0 0.0
  %485 = vmatpush2.msra.mxu0 0.0
  %486 = vmatprep.subr.mxu0 0.0
  %487 = vmatpush2.msra.mxu0 0.0
  %488 = vmatprep.mubr.f32.mxu0 0.0
  %v489 = vand.u32 %v14, 4294901760
  %v490 = vsub.f32 %v14, %v489
  %v491 = vand.u32 %v490, 4294901760
  %492 = vmatmul.mubr.f32.gmra.mxu0 %v491
  %v493 = vpop.f32.mrf.mxu0
  %v494 = vadd.f32 %v398, %v493
  %v495 = vpop.f32.mrf.mxu0
  %496 = vmatprep.mubr.f32.mxu0 0.0
  %v497 = vand.u32 %v15, 4294901760
  %v498 = vsub.f32 %v15, %v497
  %v499 = vand.u32 %v498, 4294901760
  %500 = vmatmul.mubr.f32.gmra.mxu0 %v499
  %v501 = vpop.f32.mrf.mxu0
  %v502 = vadd.f32 %v405, %v501
  %v503 = vpop.f32.mrf.mxu0
  %504 = vdwg.mxu0
  %505 = vmatprep.subr.mxu0 0.0
  %v506 = vand.u32 %v31, 4294901760
  %v507 = vsub.f32 %v31, %v506
  %v508 = vand.u32 %v507, 4294901760
  %509 = vmatpush1.msra.mxu0 %v508
  %510 = vmatprep.subr.mxu0 0.0
  %v511 = vand.u32 %v30, 4294901760
  %v512 = vsub.f32 %v30, %v511
  %v513 = vand.u32 %v512, 4294901760
  %514 = vmatpush1.msra.mxu0 %v513
  %515 = vmatprep.subr.mxu0 0.0
  %v516 = vand.u32 %v29, 4294901760
  %v517 = vsub.f32 %v29, %v516
  %v518 = vand.u32 %v517, 4294901760
  %519 = vmatpush1.msra.mxu0 %v518
  %520 = vmatprep.subr.mxu0 0.0
  %v521 = vand.u32 %v28, 4294901760
  %v522 = vsub.f32 %v28, %v521
  %v523 = vand.u32 %v522, 4294901760
  %524 = vmatpush1.msra.mxu0 %v523
  %525 = vmatprep.subr.mxu0 0.0
  %v526 = vand.u32 %v27, 4294901760
  %v527 = vsub.f32 %v27, %v526
  %v528 = vand.u32 %v527, 4294901760
  %529 = vmatpush1.msra.mxu0 %v528
  %530 = vmatprep.subr.mxu0 0.0
  %v531 = vand.u32 %v26, 4294901760
  %v532 = vsub.f32 %v26, %v531
  %v533 = vand.u32 %v532, 4294901760
  %534 = vmatpush1.msra.mxu0 %v533
  %535 = vmatprep.subr.mxu0 0.0
  %v536 = vand.u32 %v25, 4294901760
  %v537 = vsub.f32 %v25, %v536
  %v538 = vand.u32 %v537, 4294901760
  %539 = vmatpush1.msra.mxu0 %v538
  %540 = vmatprep.subr.mxu0 0.0
  %v541 = vand.u32 %v24, 4294901760
  %v542 = vsub.f32 %v24, %v541
  %v543 = vand.u32 %v542, 4294901760
  %544 = vmatpush1.msra.mxu0 %v543
  %545 = vmatprep.subr.mxu0 0.0
  %v546 = vand.u32 %v23, 4294901760
  %v547 = vsub.f32 %v23, %v546
  %v548 = vand.u32 %v547, 4294901760
  %549 = vmatpush1.msra.mxu0 %v548
  %550 = vmatprep.subr.mxu0 0.0
  %v551 = vand.u32 %v22, 4294901760
  %v552 = vsub.f32 %v22, %v551
  %v553 = vand.u32 %v552, 4294901760
  %554 = vmatpush1.msra.mxu0 %v553
  %555 = vmatprep.subr.mxu0 0.0
  %v556 = vand.u32 %v21, 4294901760
  %v557 = vsub.f32 %v21, %v556
  %v558 = vand.u32 %v557, 4294901760
  %559 = vmatpush1.msra.mxu0 %v558
  %560 = vmatprep.subr.mxu0 0.0
  %v561 = vand.u32 %v20, 4294901760
  %v562 = vsub.f32 %v20, %v561
  %v563 = vand.u32 %v562, 4294901760
  %564 = vmatpush1.msra.mxu0 %v563
  %565 = vmatprep.subr.mxu0 0.0
  %v566 = vand.u32 %v19, 4294901760
  %v567 = vsub.f32 %v19, %v566
  %v568 = vand.u32 %v567, 4294901760
  %569 = vmatpush1.msra.mxu0 %v568
  %570 = vmatprep.subr.mxu0 0.0
  %v571 = vand.u32 %v18, 4294901760
  %v572 = vsub.f32 %v18, %v571
  %v573 = vand.u32 %v572, 4294901760
  %574 = vmatpush1.msra.mxu0 %v573
  %575 = vmatprep.subr.mxu0 0.0
  %v576 = vand.u32 %v17, 4294901760
  %v577 = vsub.f32 %v17, %v576
  %v578 = vand.u32 %v577, 4294901760
  %579 = vmatpush1.msra.mxu0 %v578
  %580 = vmatprep.subr.mxu0 0.0
  %v581 = vand.u32 %v16, 4294901760
  %v582 = vsub.f32 %v16, %v581
  %v583 = vand.u32 %v582, 4294901760
  %584 = vmatpush1.msra.mxu0 %v583
  %585 = vmatprep.subr.mxu0 0.0
  %586 = vmatpush2.msra.mxu0 0.0
  %587 = vmatprep.subr.mxu0 0.0
  %588 = vmatpush2.msra.mxu0 0.0
  %589 = vmatprep.subr.mxu0 0.0
  %590 = vmatpush2.msra.mxu0 0.0
  %591 = vmatprep.subr.mxu0 0.0
  %592 = vmatpush2.msra.mxu0 0.0
  %593 = vmatprep.subr.mxu0 0.0
  %594 = vmatpush2.msra.mxu0 0.0
  %595 = vmatprep.subr.mxu0 0.0
  %596 = vmatpush2.msra.mxu0 0.0
  %597 = vmatprep.subr.mxu0 0.0
  %598 = vmatpush2.msra.mxu0 0.0
  %599 = vmatprep.subr.mxu0 0.0
  %600 = vmatpush2.msra.mxu0 0.0
  %601 = vmatprep.subr.mxu0 0.0
  %602 = vmatpush2.msra.mxu0 0.0
  %603 = vmatprep.subr.mxu0 0.0
  %604 = vmatpush2.msra.mxu0 0.0
  %605 = vmatprep.subr.mxu0 0.0
  %606 = vmatpush2.msra.mxu0 0.0
  %607 = vmatprep.subr.mxu0 0.0
  %608 = vmatpush2.msra.mxu0 0.0
  %609 = vmatprep.subr.mxu0 0.0
  %610 = vmatpush2.msra.mxu0 0.0
  %611 = vmatprep.subr.mxu0 0.0
  %612 = vmatpush2.msra.mxu0 0.0
  %613 = vmatprep.subr.mxu0 0.0
  %614 = vmatpush2.msra.mxu0 0.0
  %615 = vmatprep.subr.mxu0 0.0
  %616 = vmatpush2.msra.mxu0 0.0
  %617 = vmatprep.mubr.f32.mxu0 0.0
  %v618 = vand.u32 %v14, 4294901760
  %619 = vmatmul.mubr.f32.gmra.mxu0 %v618
  %v620 = vpop.f32.mrf.mxu0
  %v621 = vadd.f32 %v494, %v620
  %v622 = vpop.f32.mrf.mxu0
  %623 = vmatprep.mubr.f32.mxu0 0.0
  %v624 = vand.u32 %v15, 4294901760
  %625 = vmatmul.mubr.f32.gmra.mxu0 %v624
  %v626 = vpop.f32.mrf.mxu0
  %v627 = vadd.f32 %v502, %v626
  %v628 = vpop.f32.mrf.mxu0
  %629 = vdwg.mxu0
  %630 = vmatprep.subr.mxu0 0.0
  %v631 = vand.u32 %v31, 4294901760
  %632 = vmatpush1.msra.mxu0 %v631
  %633 = vmatprep.subr.mxu0 0.0
  %v634 = vand.u32 %v30, 4294901760
  %635 = vmatpush1.msra.mxu0 %v634
  %636 = vmatprep.subr.mxu0 0.0
  %v637 = vand.u32 %v29, 4294901760
  %638 = vmatpush1.msra.mxu0 %v637
  %639 = vmatprep.subr.mxu0 0.0
  %v640 = vand.u32 %v28, 4294901760
  %641 = vmatpush1.msra.mxu0 %v640
  %642 = vmatprep.subr.mxu0 0.0
  %v643 = vand.u32 %v27, 4294901760
  %644 = vmatpush1.msra.mxu0 %v643
  %645 = vmatprep.subr.mxu0 0.0
  %v646 = vand.u32 %v26, 4294901760
  %647 = vmatpush1.msra.mxu0 %v646
  %648 = vmatprep.subr.mxu0 0.0
  %v649 = vand.u32 %v25, 4294901760
  %650 = vmatpush1.msra.mxu0 %v649
  %651 = vmatprep.subr.mxu0 0.0
  %v652 = vand.u32 %v24, 4294901760
  %653 = vmatpush1.msra.mxu0 %v652
  %654 = vmatprep.subr.mxu0 0.0
  %v655 = vand.u32 %v23, 4294901760
  %656 = vmatpush1.msra.mxu0 %v655
  %657 = vmatprep.subr.mxu0 0.0
  %v658 = vand.u32 %v22, 4294901760
  %659 = vmatpush1.msra.mxu0 %v658
  %660 = vmatprep.subr.mxu0 0.0
  %v661 = vand.u32 %v21, 4294901760
  %662 = vmatpush1.msra.mxu0 %v661
  %663 = vmatprep.subr.mxu0 0.0
  %v664 = vand.u32 %v20, 4294901760
  %665 = vmatpush1.msra.mxu0 %v664
  %666 = vmatprep.subr.mxu0 0.0
  %v667 = vand.u32 %v19, 4294901760
  %668 = vmatpush1.msra.mxu0 %v667
  %669 = vmatprep.subr.mxu0 0.0
  %v670 = vand.u32 %v18, 4294901760
  %671 = vmatpush1.msra.mxu0 %v670
  %672 = vmatprep.subr.mxu0 0.0
  %v673 = vand.u32 %v17, 4294901760
  %674 = vmatpush1.msra.mxu0 %v673
  %675 = vmatprep.subr.mxu0 0.0
  %v676 = vand.u32 %v16, 4294901760
  %677 = vmatpush1.msra.mxu0 %v676
  %678 = vmatprep.subr.mxu0 0.0
  %679 = vmatpush2.msra.mxu0 0.0
  %680 = vmatprep.subr.mxu0 0.0
  %681 = vmatpush2.msra.mxu0 0.0
  %682 = vmatprep.subr.mxu0 0.0
  %683 = vmatpush2.msra.mxu0 0.0
  %684 = vmatprep.subr.mxu0 0.0
  %685 = vmatpush2.msra.mxu0 0.0
  %686 = vmatprep.subr.mxu0 0.0
  %687 = vmatpush2.msra.mxu0 0.0
  %688 = vmatprep.subr.mxu0 0.0
  %689 = vmatpush2.msra.mxu0 0.0
  %690 = vmatprep.subr.mxu0 0.0
  %691 = vmatpush2.msra.mxu0 0.0
  %692 = vmatprep.subr.mxu0 0.0
  %693 = vmatpush2.msra.mxu0 0.0
  %694 = vmatprep.subr.mxu0 0.0
  %695 = vmatpush2.msra.mxu0 0.0
  %696 = vmatprep.subr.mxu0 0.0
  %697 = vmatpush2.msra.mxu0 0.0
  %698 = vmatprep.subr.mxu0 0.0
  %699 = vmatpush2.msra.mxu0 0.0
  %700 = vmatprep.subr.mxu0 0.0
  %701 = vmatpush2.msra.mxu0 0.0
  %702 = vmatprep.subr.mxu0 0.0
  %703 = vmatpush2.msra.mxu0 0.0
  %704 = vmatprep.subr.mxu0 0.0
  %705 = vmatpush2.msra.mxu0 0.0
  %706 = vmatprep.subr.mxu0 0.0
  %707 = vmatpush2.msra.mxu0 0.0
  %708 = vmatprep.subr.mxu0 0.0
  %709 = vmatpush2.msra.mxu0 0.0
  %710 = vmatprep.mubr.f32.mxu0 0.0
  %v711 = vand.u32 %v14, 4294901760
  %712 = vmatmul.mubr.f32.gmra.mxu0 %v711
  %v713 = vpop.f32.mrf.mxu0
  %v714 = vadd.f32 %v621, %v713
  %v715 = vpop.f32.mrf.mxu0
  %716 = vmatprep.mubr.f32.mxu0 0.0
  %v717 = vand.u32 %v15, 4294901760
  %718 = vmatmul.mubr.f32.gmra.mxu0 %v717
  %v719 = vpop.f32.mrf.mxu0
  %v720 = vadd.f32 %v627, %v719
  %v721 = vpop.f32.mrf.mxu0
  %722 = vdwg.mxu0
  %723 = vst [vmem:[%s3] sm:$0xff] %v714
  %724 = vst [vmem:[%s3 + $0x8] sm:$0xff] %v720
  // Predicated region
  $region14: #{conv1d.1} parent=0 // pred_check
    _
  $region15: #{conv1d.1} parent=0 // pred_check_branch
    %726 = sbr.rel (0) target = $region17
  $region16: #{conv1d.1} parent=0 // pred_region
    _
  $region17: #{conv1d.1} parent=0 // pred_fallthru
    _
  // Predicated region
  $region18: #{conv1d.1} parent=0 // pred_check
    _
  $region19: #{conv1d.1} parent=0 // pred_check_branch
    %728 = sbr.rel (0) target = $region21
  $region20: #{conv1d.1} parent=0 // pred_region
    _
  $region21: #{conv1d.1} parent=0 // pred_fallthru
    _

</llo_original>
